<compile_context>
chip_gen: v7x
topology: tpu7x:2x2x1
jax: 0.10.0
libtpu: 0.0.40
codegen_flags: <defaults>
</compile_context>

<pallas_src>
import dataclasses
import math

import jax
import jax.numpy as jnp
from jax.experimental import pallas as pl
from jax.experimental.pallas import tpu as pltpu


@dataclasses.dataclass(frozen=True)
class Config:
    sigmoid: bool = True


_LANE = 128
_MAX_W = 4096          # cap on the widened lane dim (bounds per-step gate cost)


# ---------------------------------------------------------------------------
# Kernel bodies: p_ref is (1, W); z_ref / o_ref are (TR, W).
# ---------------------------------------------------------------------------
def _gate_kernel_sigmoid(p_ref, z_ref, o_ref):
    # Sigmoid in f32 (EUP), then cast; multiply happens in the output dtype.
    g = jax.nn.sigmoid(p_ref[...].astype(jnp.float32)).astype(o_ref.dtype)
    o_ref[...] = z_ref[...].astype(o_ref.dtype) * g   # (1, W) bcast over (TR, W)


def _gate_kernel_identity(p_ref, z_ref, o_ref):
    g = p_ref[...].astype(o_ref.dtype)
    o_ref[...] = z_ref[...].astype(o_ref.dtype) * g


# ---------------------------------------------------------------------------
# Layout / budget helpers
# ---------------------------------------------------------------------------
def _round_up(x, m):
    return ((x + m - 1) // m) * m


def _chip_budget():
    """Per-generation (block_target_bytes, vmem_limit_cap_bytes), keyed off
    physical VMEM size (v7x: 64 MiB; v5e/v6e: 128 MiB)."""
    vmem_phys = 128 * 1024 * 1024
    try:
        vmem_phys = int(pltpu.get_tpu_info().vmem_capacity_bytes)
    except Exception:
        pass
    if vmem_phys <= 64 * 1024 * 1024:
        # v7x-class: bigger blocks to re-amortize per-step overhead against the
        # ~3.2 TB/s HBM; cap scoped VMEM at 75% of physical (~48 MiB).
        return 5 * 1024 * 1024, (vmem_phys * 3) // 4
    # v5e/v6e: 2 MiB blocks sit at the measured roofline knee.
    # TODO(synk): a chip-version probe could bump v6e to 4 MiB (+1-2%).
    return 2 * 1024 * 1024, 64 * 1024 * 1024


def _fold_plan(R0, C, max_w=_MAX_W):
    """Pick the smallest k so W = k*C is a multiple of 128 (lane-dense stores).

    Prefers a k that also divides R0 (no ragged tail); otherwise returns the
    minimal aligned k and the wrapper peels a < k row tail.  Returns (1, C)
    (masked stores, still correct) only when no fold fits under max_w.
    """
    if C % _LANE == 0:
        return 1, C
    k_base = _LANE // math.gcd(C, _LANE)
    if k_base * C > max_w or R0 < k_base:
        return 1, C
    k = k_base
    while k <= R0 and k * C <= max_w:
        if R0 % k == 0:
            return k, k * C                 # smallest aligned fold, no tail
        k += k_base
    return k_base, k_base * C               # smallest aligned fold; tail peeled


def _row_tile(R, W, in_itemsize, out_itemsize, target_bytes):
    """Rows per block: ~target_bytes per streamed buffer, sublane dim rounded to
    the dtype-native tile (8 f32 / 16 bf16 / 32 int8), and >= 2 grid tiles
    whenever the row count allows (feeds both v7x TensorCores)."""
    sub = max(8, 32 // max(1, min(in_itemsize, out_itemsize)))
    if R <= sub:
        return R                            # single full-extent block
    per_row = max(1, W * in_itemsize)
    tr = max(sub, (target_bytes // per_row) // sub * sub)
    if tr < R:
        return tr                           # grid already has >= 2 steps
    # One block would swallow the array: split into 2..4 tiles for megacore.
    pieces = min(4, R // sub)
    if pieces >= 2:
        tr = _round_up(-(-R // pieces), sub)
        if tr < R:
            return tr
    return R


# ---------------------------------------------------------------------------
# One tiled pallas_call on a 2D (R, W) slab with a resident (1, W) gate row.
# ---------------------------------------------------------------------------
def _gated_call(z2d, p_row, *, sigmoid, out_dtype, block_target_bytes,
                vmem_cap, donate):
    R, W = z2d.shape
    in_size = jnp.dtype(z2d.dtype).itemsize
    out_size = jnp.dtype(out_dtype).itemsize
    p_size = jnp.dtype(p_row.dtype).itemsize

    TR = _row_tile(R, W, in_size, out_size, block_target_bytes)
    steps = pl.cdiv(R, TR)
    kernel = _gate_kernel_sigmoid if sigmoid else _gate_kernel_identity

    # in + out streams double buffered, plus the (1, W) gate and slack.
    block_bytes = TR * W * (in_size + out_size)
    gate_bytes = W * p_size
    vmem_bytes = int(min(vmem_cap,
                         max(4 * 1024 * 1024,
                             2 * block_bytes + 2 * gate_bytes + (1 << 20))))

    cost = pl.CostEstimate(
        flops=int(R) * int(W),
        transcendentals=(int(W) * int(steps)) if sigmoid else 0,
        bytes_accessed=int(R) * int(W) * (in_size + out_size) + gate_bytes)

    call_kwargs = {}
    if donate and jnp.dtype(z2d.dtype) == jnp.dtype(out_dtype):
        # Inputs are (gate_row, z2d); alias z's HBM buffer onto the output.
        call_kwargs["input_output_aliases"] = {1: 0}

    # TODO(synk): consider CompilerParams(allow_input_fusion=...) so an
    # elementwise producer of z can fuse into this call; the only
    # order-of-magnitude lever left is removing the extra HBM round trip.
    return pl.pallas_call(
        kernel,
        out_shape=jax.ShapeDtypeStruct((R, W), out_dtype),
        grid_spec=pltpu.PrefetchScalarGridSpec(
            num_scalar_prefetch=0,
            grid=(steps,),
            in_specs=[
                pl.BlockSpec((1, W), lambda i: (0, 0)),    # gate row (resident)
                pl.BlockSpec((TR, W), lambda i: (i, 0)),   # z row tile
            ],
            out_specs=pl.BlockSpec((TR, W), lambda i: (i, 0)),
        ),
        compiler_params=pltpu.CompilerParams(
            dimension_semantics=("parallel",),
            vmem_limit_bytes=vmem_bytes,
        ),
        cost_estimate=cost,
        **call_kwargs,
    )(p_row, z2d)


# ---------------------------------------------------------------------------
# Wrapper
# ---------------------------------------------------------------------------
def channel_pruning_v2(z, param, config: Config, *,
                       block_target_bytes: int | None = None,
                       donate_z: bool = False):
    """Pallas implementation of ChannelPruningv2.forward.

    z:     (..., C) float array (channels-last)
    param: (1, C)   float array (the nn.Parameter)

    Output dtype follows the reference promotion rule
    (jnp.result_type(z.dtype, param.dtype)), e.g. bf16 z * f32 param -> f32.
    Set donate_z=True when the caller can donate z (same dtype as the output)
    to let XLA reuse z's HBM buffer for the result.
    """
    C = param.shape[-1]
    assert param.shape == (1, C), "param must be (1, in_channels)"
    assert z.ndim >= 1 and z.shape[-1] == C, (
        "z must be channels-last with trailing dim == in_channels")

    out_dtype = jnp.result_type(z.dtype, param.dtype)
    orig_shape = z.shape
    R0 = math.prod(z.shape[:-1]) if z.ndim > 1 else 1

    default_block, vmem_cap = _chip_budget()
    if block_target_bytes is None:
        block_target_bytes = default_block

    sig = bool(config.sigmoid)
    p_base = param.reshape(1, C)

    k, W = _fold_plan(R0, C)

    if k == 1:
        # Either C is already lane-aligned, or no fold fits: single call.
        z2d = z.reshape(R0, C)
        out2d = _gated_call(z2d, p_base, sigmoid=sig, out_dtype=out_dtype,
                            block_target_bytes=block_target_bytes,
                            vmem_cap=vmem_cap, donate=donate_z)
        return out2d.reshape(orig_shape)

    # Lane-dense fold: k channel rows -> one wide row of W = k*C lanes.
    R_main = (R0 // k) * k
    tail = R0 - R_main
    p_wide = jnp.tile(p_base, (1, k))
    z_flat = z.reshape(R0, C)

    if tail == 0:
        z_main = z_flat.reshape(R_main // k, W)          # pure view, free
        out_main = _gated_call(z_main, p_wide, sigmoid=sig, out_dtype=out_dtype,
                               block_target_bytes=block_target_bytes,
                               vmem_cap=vmem_cap, donate=donate_z)
        return out_main.reshape(orig_shape)

    # Ragged row count: keep the bulk on the lane-dense path, peel a < k row
    # tail into a second tiny pallas_call.
    # TODO(synk): for very large ragged inputs, an input_output_aliases in-place
    # tail write would avoid the stitch copy done by jnp.concatenate.
    z_main = z_flat[:R_main].reshape(R_main // k, W)
    out_main = _gated_call(z_main, p_wide, sigmoid=sig, out_dtype=out_dtype,
                           block_target_bytes=block_target_bytes,
                           vmem_cap=vmem_cap, donate=False)
    z_tail = z_flat[R_main:]
    out_tail = _gated_call(z_tail, p_base, sigmoid=sig, out_dtype=out_dtype,
                           block_target_bytes=block_target_bytes,
                           vmem_cap=vmem_cap, donate=False)
    out = jnp.concatenate([out_main.reshape(R_main, C), out_tail], axis=0)
    return out.reshape(orig_shape)


def channel_pruning_v2_ref(z, param, config: Config):
    b = jax.nn.sigmoid(param) if config.sigmoid else param
    return z * b  # (..., C) * (1, C) broadcast, same as PyTorch


if __name__ == "__main__":
    key = jax.random.PRNGKey(0)
    kz, kp, kz2, kz3, kz4 = jax.random.split(key, 5)

    # Small shapes consistent with the module: batch=2, seq(=flattened
    # spatial)=8, in_channels=32, channels-last.
    B, S, C = 2, 8, 32
    z = jax.random.normal(kz, (B, S, C), dtype=jnp.float32)

    # nn.Parameter(torch.ones(1, in_channels)) -> ones, plus a tiny
    # deterministic perturbation so the sigmoid gate is non-trivial.
    param = jnp.ones((1, C), dtype=jnp.float32) + 0.1 * jax.random.normal(
        kp, (1, C), dtype=jnp.float32)

    cfg_sig = Config(sigmoid=True)
    cfg_id = Config(sigmoid=False)

    # 1) sigmoid branch (lane-dense fold k=4, W=128)
    out = jax.block_until_ready(channel_pruning_v2(z, param, cfg_sig))
    ref = channel_pruning_v2_ref(z, param, cfg_sig)
    assert out.shape == ref.shape and out.dtype == ref.dtype
    assert jnp.allclose(out, ref, atol=1e-6, rtol=1e-6), "mismatch (sigmoid)"

    # 2) identity (non-sigmoid) branch
    out2 = jax.block_until_ready(channel_pruning_v2(z, param, cfg_id))
    ref2 = channel_pruning_v2_ref(z, param, cfg_id)
    assert jnp.allclose(out2, ref2, atol=1e-6, rtol=1e-6), "mismatch (identity)"

    # 3) larger case with a tiny block target: exercises the multi-step
    #    row-tiled grid on the folded (128, 128) layout.
    z_big = jax.random.normal(kz2, (4, 128, C), dtype=jnp.float32)
    out3 = jax.block_until_ready(
        channel_pruning_v2(z_big, param, cfg_sig, block_target_bytes=8 * 1024))
    ref3 = channel_pruning_v2_ref(z_big, param, cfg_sig)
    assert jnp.allclose(out3, ref3, atol=1e-6, rtol=1e-6), "mismatch (tiled grid)"

    # 4) ragged row count (2*7=14 rows, k=4): folded bulk + tiny tail call.
    z_rag = jax.random.normal(kz3, (2, 7, C), dtype=jnp.float32)
    out4 = jax.block_until_ready(channel_pruning_v2(z_rag, param, cfg_sig))
    ref4 = channel_pruning_v2_ref(z_rag, param, cfg_sig)
    assert out4.shape == ref4.shape
    assert jnp.allclose(out4, ref4, atol=1e-6, rtol=1e-6), "mismatch (ragged tail)"

    # 5) bf16 activations with f32 gate -> promoted f32 output (matches ref).
    z_bf = jax.random.normal(kz4, (2, 8, C), dtype=jnp.float32).astype(jnp.bfloat16)
    out5 = jax.block_until_ready(channel_pruning_v2(z_bf, param, cfg_sig))
    ref5 = channel_pruning_v2_ref(z_bf, param, cfg_sig)
    assert out5.dtype == ref5.dtype and out5.shape == ref5.shape
    assert jnp.allclose(out5, ref5, atol=1e-5, rtol=1e-5), "mismatch (bf16 promo)"

    print("KERNEL_OK")
</pallas_src>

<mosaic_0001>
module attributes {stable_mosaic.version = 11 : i64} {
  func.func @_gate_kernel_sigmoid(%arg0: i32, %arg1: memref<1x128xf32, #tpu.memory_space<vmem>>, %arg2: memref<4x128xf32, #tpu.memory_space<vmem>>, %arg3: memref<4x128xf32, #tpu.memory_space<vmem>>) attributes {dimension_semantics = [#tpu.dimension_semantics<parallel>], iteration_bounds = array<i64: 1>, scalar_prefetch = 0 : i64, scratch_operands = 0 : i64, tpu.core_type = #tpu.core_type<tc>, window_params = [{pipeline_mode = #tpu.pipeline_mode<synchronous>, transform_indices = @transform_0, window_bounds = array<i64: 1, 128>}, {transform_indices = @transform_1, window_bounds = array<i64: 4, 128>}, {transform_indices = @transform_2, window_bounds = array<i64: 4, 128>}]} {
    %c0 = arith.constant 0 : index
    %c0_0 = arith.constant 0 : index
    %0 = vector.load %arg1[%c0, %c0_0] : memref<1x128xf32, #tpu.memory_space<vmem>>, vector<1x128xf32>
    %1 = arith.negf %0 : vector<1x128xf32>
    %2 = math.exp %1 : vector<1x128xf32>
    %cst = arith.constant 1.000000e+00 : f32
    %3 = vector.broadcast %cst : f32 to vector<1x128xf32>
    %4 = arith.addf %3, %2 : vector<1x128xf32>
    %5 = arith.divf %3, %4 : vector<1x128xf32>
    %c0_1 = arith.constant 0 : index
    %c0_2 = arith.constant 0 : index
    %6 = vector.load %arg2[%c0_1, %c0_2] : memref<4x128xf32, #tpu.memory_space<vmem>>, vector<4x128xf32>
    %7 = vector.broadcast %5 : vector<1x128xf32> to vector<4x128xf32>
    %8 = arith.mulf %6, %7 : vector<4x128xf32>
    %c0_3 = arith.constant 0 : index
    %c0_4 = arith.constant 0 : index
    %9 = vector.load %arg3[%c0_3, %c0_4] : memref<4x128xf32, #tpu.memory_space<vmem>>, vector<4x128xf32>
    tpu.vector_store %arg3[%c0_3, %c0_4], %8 {strides = array<i32>} : memref<4x128xf32, #tpu.memory_space<vmem>>, vector<4x128xf32>,
    return
  }
  func.func @transform_0(%arg0: i32) -> (i32, i32) {
    %c0_i32 = arith.constant 0 : i32
    %c0_i32_0 = arith.constant 0 : i32
    %c0_i32_1 = arith.constant 0 : i32
    return %c0_i32, %c0_i32_0 : i32, i32
  }
  func.func @transform_1(%arg0: i32) -> (i32, i32) {
    %c0_i32 = arith.constant 0 : i32
    %c0_i32_0 = arith.constant 0 : i32
    return %arg0, %c0_i32 : i32, i32
  }
  func.func @transform_2(%arg0: i32) -> (i32, i32) {
    %c0_i32 = arith.constant 0 : i32
    %c0_i32_0 = arith.constant 0 : i32
    return %arg0, %c0_i32 : i32, i32
  }
}

</mosaic_0001>

<llo_original>
// kernel: tpu_custom_call.1
$region0: #{tpu_custom_call.1}
  #allocation0 [shape = 'u32[]', space=smem, size = 0x4, offset = 0x4, fixed_abs, tag = 'smem constant byte address 0x4 - core index']
  #allocation1 [shape = 'u32[144,128]{1,0:T(1,128)}', space=vmem, size = 0x12000, scoped, tag = 'internal scratch']
  %s0 = inlined_call_operand.hbm [shape: f32[1,128], index: 0, kind: input, shape index: {}]
  %s1 = inlined_call_operand.hbm [shape: f32[4,128], index: 1, kind: input, shape index: {}]
  %s2 = inlined_call_operand.hbm [shape: f32[4,128], index: 2, kind: output, shape index: {}]
  %s3 = sld [smem:[#allocation0]]
  $region26: #{tpu_custom_call.1} parent=0
    _
  %s5 = ssub.s32 1, %s3
  %s6 = scalar_select 0, %s5, %s3
  $region1: #{tpu_custom_call.1} parent=0
    #allocation2 [shape = 'u8[512]{0}', space=vmem, size = 0x400, scoped, tag = 'input window, operand 0, single buffered']
    #allocation3 [shape = 's32[1]{0}', space=sflag, size = 0x4, scoped, tag = 'scoped memory for tpu_custom_call.1']
    #allocation4 [shape = 's32[1]{0}', space=sflag, size = 0x4, scoped, tag = 'scoped memory for tpu_custom_call.1']
    #allocation5 [shape = 'u8[2048]{0}', space=vmem, size = 0x800, scoped, tag = 'input window, operand 1, single buffered']
    #allocation6 [shape = 's32[1]{0}', space=sflag, size = 0x4, scoped, tag = 'scoped memory for tpu_custom_call.1']
    #allocation7 [shape = 'u8[2048]{0}', space=vmem, size = 0x800, scoped, tag = 'output window, operand 0, single buffered']
    %7 = vsyncpa [#allocation3], 0
    %8 = vsyncpa [#allocation6], 0
    %9 = vsyncpa [#allocation4], 0
    // Predicated region
    $region2: #{tpu_custom_call.1} parent=1 // pred_check
      _
    $region3: #{tpu_custom_call.1} parent=1 // pred_check_branch
      %11 = sbr.rel (0) target = $region5
    $region4: #{tpu_custom_call.1} parent=1 // pred_region
      %s13 = ssub.s32 16, 16
      %14 = vsyncadd [#allocation3], %s13
      %s16 = sshll.u32 [#allocation2], 4
      %s17 = int_to_ptr.vmem [resolvable:$true] %s16
      %19 = dma.hbm_to_vmem [thread:$0]  %s0, 16, %s17, [#allocation3]
    $region5: #{tpu_custom_call.1} parent=1 // pred_fallthru
      _
    // Predicated region
    $region6: #{tpu_custom_call.1} parent=1 // pred_check
      _
    $region7: #{tpu_custom_call.1} parent=1 // pred_check_branch
      %21 = sbr.rel (0) target = $region9
    $region8: #{tpu_custom_call.1} parent=1 // pred_region
      %s23 = ssub.s32 64, 64
      %24 = vsyncadd [#allocation6], %s23
      %s26 = sshll.u32 [#allocation5], 4
      %s27 = int_to_ptr.vmem [resolvable:$true] %s26
      %29 = dma.hbm_to_vmem [thread:$0]  %s1, 64, %s27, [#allocation6]
    $region9: #{tpu_custom_call.1} parent=1 // pred_fallthru
      _
    // Predicated region
    $region10: #{tpu_custom_call.1} parent=1 // pred_check
      _
    $region11: #{tpu_custom_call.1} parent=1 // pred_check_branch
      %31 = sbr.rel (0) target = $region13
    $region12: #{tpu_custom_call.1} parent=1 // pred_region
      %32 = dma.done [#allocation3], 16
    $region13: #{tpu_custom_call.1} parent=1 // pred_fallthru
      _
    // Predicated region
    $region14: #{tpu_custom_call.1} parent=1 // pred_check
      _
    $region15: #{tpu_custom_call.1} parent=1 // pred_check_branch
      %34 = sbr.rel (0) target = $region17
    $region16: #{tpu_custom_call.1} parent=1 // pred_region
      %35 = dma.done [#allocation6], 64
    $region17: #{tpu_custom_call.1} parent=1 // pred_fallthru
      _
    %v36 = vld [vmem:[#allocation2] sm:$0x1]
    %v37 = vxor.u32 %v36, 2147483648
    %v38 = vmul.f32 %v37, 1.442695
    %v39 = vpow.pop %v38
    %v40 = vadd.f32 %v39, 1.0
    %v41 = vrcp.pop %v40
    %v42 = vmul.f32 1.0, %v41
    %v43 = vld [vmem:[#allocation5] sm:$0xf]
    %v45 = vlaneseq
    %v46 = vshrl.u32 %v45, 7
    %v47 = vsub.s32 0, %v46
    %v48 = vrot.slane %v42, %v47
    %v50 = vmul.f32 %v43, %v48
    %51 = vst [vmem:[#allocation7] sm:$0xf] %v50
    // Predicated region
    $region18: #{tpu_custom_call.1} parent=1 // pred_check
      _
    $region19: #{tpu_custom_call.1} parent=1 // pred_check_branch
      %53 = sbr.rel (0) target = $region21
    $region20: #{tpu_custom_call.1} parent=1 // pred_region
      %s55 = ssub.s32 64, 64
      %56 = vsyncadd [#allocation4], %s55
      %s58 = sshll.u32 [#allocation7], 4
      %s59 = int_to_ptr.vmem [resolvable:$true] %s58
      %61 = dma.vmem_to_hbm [thread:$0]  %s59, 64, %s2, [#allocation4]
    $region21: #{tpu_custom_call.1} parent=1 // pred_fallthru
      _
    // Predicated region
    $region22: #{tpu_custom_call.1} parent=1 // pred_check
      _
    $region23: #{tpu_custom_call.1} parent=1 // pred_check_branch
      %63 = sbr.rel (0) target = $region25
    $region24: #{tpu_custom_call.1} parent=1 // pred_region
      %64 = dma.done [#allocation4], 64
    $region25: #{tpu_custom_call.1} parent=1 // pred_fallthru
      _
    %65 = vsyncpa [#allocation3], 1
    %66 = vsyncpa [#allocation6], 1
    %67 = vsyncpa [#allocation4], 1

</llo_original>
